<compile_context>
chip_gen: v6e
topology: v6e:2x2x1
jax: 0.10.0
libtpu: 0.0.40
codegen_flags: <defaults>
</compile_context>

<pallas_src>
import functools

import jax
import jax.numpy as jnp
from jax.experimental import pallas as pl
from jax.experimental.pallas import tpu as pltpu

BN_EPS = 1e-5
IMG_FEAT = 1536          # EfficientNet-B3 feature size (folded away at param time)
LANE = 128               # lane-dense padding for the classifier output


def _round_up(x, m):
    return (x + m - 1) // m * m


# -----------------------------------------------------------------------------
# Kernel: one batch tile per grid step; all weights VMEM-resident.
# -----------------------------------------------------------------------------
def _combined_head_kernel(
    pooled_ref, tab_ref,                       # batch-tiled activations
    bn_scale_ref, bn_shift_ref,                # tabular BatchNorm1d affine (f32, VPU)
    w_img_ref, b_img_ref,                      # folded backbone + image_fc + BN
    w_t1_ref, b_t1_ref, w_t2_ref, b_t2_ref,    # tabular_model (lane-padded)
    w_c1_img_ref, w_c1_tab_ref, b_c1_ref,      # classifier layer 1 (split concat)
    w_c2_ref, b_c2_ref,                        # classifier layer 2 (lane-padded)
    out_ref,
):
    f32 = jnp.float32
    bf16 = jnp.bfloat16

    # ---- image path: surrogate backbone projection + image_fc + BatchNorm1d
    #      folded into a single (C, 512) weight; ReLU; Dropout(eval)=identity.
    h_img = (jnp.dot(pooled_ref[...], w_img_ref[...],
                     preferred_element_type=f32) + b_img_ref[...])
    h_img = jnp.maximum(h_img, 0.0)

    # ---- tabular path: BatchNorm1d(td) as f32 affine -> Linear(td,128) -> ReLU
    #      -> Dropout(eval) -> Linear(128,64 padded to 128) -> ReLU
    tn = tab_ref[...] * bn_scale_ref[...] + bn_shift_ref[...]
    h1 = (jnp.dot(tn.astype(bf16), w_t1_ref[...],
                  preferred_element_type=f32) + b_t1_ref[...])
    h1 = jnp.maximum(h1, 0.0)
    h2 = (jnp.dot(h1.astype(bf16), w_t2_ref[...],
                  preferred_element_type=f32) + b_t2_ref[...])
    h2 = jnp.maximum(h2, 0.0)

    # ---- classifier: cat([img(512), tab(64)]) -> Linear(576,256) -> ReLU ->
    #      Dropout(eval) -> Linear(256, num_classes padded to 128)
    # concat realized as split weights: cat(a,b) @ W == a @ W[:512] + b @ W[512:]
    c = (jnp.dot(h_img.astype(bf16), w_c1_img_ref[...], preferred_element_type=f32)
         + jnp.dot(h2.astype(bf16), w_c1_tab_ref[...], preferred_element_type=f32)
         + b_c1_ref[...])
    c = jnp.maximum(c, 0.0)
    logits = (jnp.dot(c.astype(bf16), w_c2_ref[...],
                      preferred_element_type=f32) + b_c2_ref[...])
    out_ref[...] = logits.astype(out_ref.dtype)


# -----------------------------------------------------------------------------
# Wrapper
# -----------------------------------------------------------------------------
@functools.partial(jax.jit, static_argnames=("num_classes",))
def combined_model_forward(images, tabular, params, *, num_classes):
    B = images.shape[0]
    C = images.shape[1]
    td = tabular.shape[1]
    nc_pad = params["w_c2"].shape[1]

    # Surrogate backbone GAP (tiny glue) — the projection itself is folded into
    # the image_fc weight inside the kernel.  bf16 activations halve input DMA.
    pooled = jnp.mean(images, axis=(2, 3)).astype(jnp.bfloat16)       # (B, C)
    tabular = tabular.astype(jnp.float32)                             # normalized in-kernel

    # Batch tiling: 16-row aligned (bf16 sublane packing), capped at 256 to fill
    # the 256-wide MXU M dim on v6e/v7x; keep >=2 grid steps when B allows so the
    # "parallel" batch axis can span both v7x TensorCores.
    tile_b = min(256, _round_up(B, 16))
    if B > 16 and _round_up(B, tile_b) // tile_b < 2:
        tile_b = max(16, _round_up((B + 1) // 2, 16))
    b_pad = _round_up(B, tile_b)
    if b_pad != B:
        pooled = jnp.pad(pooled, ((0, b_pad - B), (0, 0)))
        tabular = jnp.pad(tabular, ((0, b_pad - B), (0, 0)))

    weights = (
        params["bn_scale"], params["bn_shift"],
        params["w_img"], params["b_img"],
        params["w_t1"], params["b_t1"], params["w_t2"], params["b_t2"],
        params["w_c1_img"], params["w_c1_tab"], params["b_c1"],
        params["w_c2"], params["b_c2"],
    )

    def tiled(feat):          # batch-tiled activations / output
        return pl.BlockSpec((tile_b, feat), lambda i: (i, 0))

    def resident(arr):        # whole array, fetched once, single-buffered in VMEM
        return pl.BlockSpec(arr.shape, lambda i: (0, 0),
                            pipeline_mode=pl.Buffered(1))

    in_specs = [tiled(C), tiled(td)] + [resident(a) for a in weights]

    out_padded = pl.pallas_call(
        _combined_head_kernel,
        out_shape=jax.ShapeDtypeStruct((b_pad, nc_pad), jnp.float32),
        grid_spec=pltpu.PrefetchScalarGridSpec(
            num_scalar_prefetch=0,
            grid=(b_pad // tile_b,),
            in_specs=in_specs,
            out_specs=tiled(nc_pad),
        ),
        compiler_params=pltpu.CompilerParams(
            dimension_semantics=("parallel",),
            vmem_limit_bytes=32 << 20,
        ),
    )(pooled, tabular, *weights)

    # Strip batch padding and lane padding of the class dimension.
    return out_padded[:B, :num_classes]


# -----------------------------------------------------------------------------
# Parameter construction: backbone projection + image_fc + its BN folded into a
# single (C, 512) weight; tabular BN kept as an f32 affine; lane-padded tails.
# -----------------------------------------------------------------------------
def make_params(key, in_channels, tabular_dim, num_classes):
    ks = jax.random.split(key, 16)
    k = iter(ks)
    bf16 = jnp.bfloat16
    nc_pad = _round_up(num_classes, LANE)

    def lin(kk, fan_in, fan_out):
        return jax.random.normal(kk, (fan_in, fan_out), jnp.float32) * (1.0 / jnp.sqrt(fan_in))

    def bias(kk, dim):
        return jax.random.normal(kk, (dim,), jnp.float32) * 0.01

    def bn_stats(kk, dim):
        k1, k2, k3, k4 = jax.random.split(kk, 4)
        g = 1.0 + 0.1 * jax.random.normal(k1, (dim,), jnp.float32)
        b = 0.1 * jax.random.normal(k2, (dim,), jnp.float32)
        m = 0.1 * jax.random.normal(k3, (dim,), jnp.float32)
        v = 1.0 + 0.1 * jax.nn.softplus(jax.random.normal(k4, (dim,), jnp.float32))
        scale = g / jnp.sqrt(v + BN_EPS)
        shift = b - m * scale
        return scale, shift

    params = {}

    # Surrogate backbone projection (C, 1536) — folded below, never shipped.
    w_bb = lin(next(k), in_channels, IMG_FEAT)
    b_bb = bias(next(k), IMG_FEAT)

    # image_fc: Linear(1536, 512) + BatchNorm1d(512) -> folded affine
    w_img = lin(next(k), IMG_FEAT, 512)
    b_img = bias(next(k), 512)
    s_img, sh_img = bn_stats(next(k), 512)
    w_img_eff = w_img * s_img[None, :]
    b_img_eff = b_img * s_img + sh_img
    # Fold: relu((x @ Wb + bb) @ Wi + bi) == relu(x @ (Wb @ Wi) + (bb @ Wi + bi))
    params["w_img"] = (w_bb @ w_img_eff).astype(bf16)                 # (C, 512)
    params["b_img"] = (b_bb @ w_img_eff + b_img_eff)[None, :]         # (1, 512) f32

    # tabular_model: BatchNorm1d(td) as f32 affine (applied in-kernel), then
    # Linear(td,128) and Linear(128,64) padded to 128 lanes.
    s_tab, sh_tab = bn_stats(next(k), tabular_dim)
    params["bn_scale"] = s_tab[None, :]
    params["bn_shift"] = sh_tab[None, :]
    params["w_t1"] = lin(next(k), tabular_dim, 128).astype(bf16)
    params["b_t1"] = bias(next(k), 128)[None, :]
    w_t2 = lin(next(k), 128, 64)
    b_t2 = bias(next(k), 64)
    params["w_t2"] = jnp.pad(w_t2, ((0, 0), (0, 64))).astype(bf16)    # (128, 128)
    params["b_t2"] = jnp.pad(b_t2, (0, 64))[None, :]                  # (1, 128)

    # classifier: Linear(512+64, 256) split for the concat (tab half padded to
    # 128 rows with zeros); Linear(256, nc) lane-padded.
    w_c1 = lin(next(k), 512 + 64, 256)
    params["w_c1_img"] = w_c1[:512, :].astype(bf16)
    params["w_c1_tab"] = jnp.pad(w_c1[512:, :], ((0, 64), (0, 0))).astype(bf16)
    params["b_c1"] = bias(next(k), 256)[None, :]

    w_c2 = lin(next(k), 256, num_classes)
    b_c2 = bias(next(k), num_classes)
    params["w_c2"] = jnp.pad(w_c2, ((0, 0), (0, nc_pad - num_classes))).astype(bf16)
    params["b_c2"] = jnp.pad(b_c2, (0, nc_pad - num_classes))[None, :]
    return params


# -----------------------------------------------------------------------------
# Pure-JAX reference of the identical (folded, bf16-weight) math.
# -----------------------------------------------------------------------------
def _reference_forward(images, tabular, params, num_classes):
    f32, bf16 = jnp.float32, jnp.bfloat16
    pooled = jnp.mean(images, axis=(2, 3)).astype(bf16)
    h_img = jnp.maximum(
        jnp.dot(pooled, params["w_img"], preferred_element_type=f32)
        + params["b_img"], 0.0)
    tn = tabular.astype(f32) * params["bn_scale"] + params["bn_shift"]
    h1 = jnp.maximum(
        jnp.dot(tn.astype(bf16), params["w_t1"], preferred_element_type=f32)
        + params["b_t1"], 0.0)
    h2 = jnp.maximum(
        jnp.dot(h1.astype(bf16), params["w_t2"], preferred_element_type=f32)
        + params["b_t2"], 0.0)
    c = jnp.maximum(
        jnp.dot(h_img.astype(bf16), params["w_c1_img"], preferred_element_type=f32)
        + jnp.dot(h2.astype(bf16), params["w_c1_tab"], preferred_element_type=f32)
        + params["b_c1"], 0.0)
    logits = (jnp.dot(c.astype(bf16), params["w_c2"], preferred_element_type=f32)
              + params["b_c2"])
    return logits[:, :num_classes]


if __name__ == "__main__":
    B, C, H, W = 4, 3, 32, 32
    TABULAR_DIM = 16
    NUM_CLASSES = 10

    key = jax.random.PRNGKey(0)
    k_img, k_tab, k_par = jax.random.split(key, 3)

    images = jax.random.normal(k_img, (B, C, H, W), jnp.float32)       # NCHW
    tabular = jax.random.normal(k_tab, (B, TABULAR_DIM), jnp.float32)
    params = make_params(k_par, C, TABULAR_DIM, NUM_CLASSES)

    logits = combined_model_forward(images, tabular, params, num_classes=NUM_CLASSES)
    logits = jax.block_until_ready(logits)

    ref = _reference_forward(images, tabular, params, NUM_CLASSES)
    assert logits.shape == (B, NUM_CLASSES)
    assert jnp.allclose(logits, ref, atol=2e-3, rtol=2e-3), "mismatch vs reference"

    print("KERNEL_OK")
</pallas_src>

<mosaic_0001>
module attributes {stable_mosaic.version = 11 : i64} {
  func.func @_combined_head_kernel(%arg0: i32, %arg1: memref<16x3xbf16, #tpu.memory_space<vmem>>, %arg2: memref<16x16xf32, #tpu.memory_space<vmem>>, %arg3: memref<1x16xf32, #tpu.memory_space<vmem>>, %arg4: memref<1x16xf32, #tpu.memory_space<vmem>>, %arg5: memref<3x512xbf16, #tpu.memory_space<vmem>>, %arg6: memref<1x512xf32, #tpu.memory_space<vmem>>, %arg7: memref<16x128xbf16, #tpu.memory_space<vmem>>, %arg8: memref<1x128xf32, #tpu.memory_space<vmem>>, %arg9: memref<128x128xbf16, #tpu.memory_space<vmem>>, %arg10: memref<1x128xf32, #tpu.memory_space<vmem>>, %arg11: memref<512x256xbf16, #tpu.memory_space<vmem>>, %arg12: memref<128x256xbf16, #tpu.memory_space<vmem>>, %arg13: memref<1x256xf32, #tpu.memory_space<vmem>>, %arg14: memref<256x128xbf16, #tpu.memory_space<vmem>>, %arg15: memref<1x128xf32, #tpu.memory_space<vmem>>, %arg16: memref<16x128xf32, #tpu.memory_space<vmem>>) attributes {dimension_semantics = [#tpu.dimension_semantics<parallel>], iteration_bounds = array<i64: 1>, scalar_prefetch = 0 : i64, scratch_operands = 0 : i64, tpu.core_type = #tpu.core_type<tc>, window_params = [{transform_indices = @transform_0, window_bounds = array<i64: 16, 3>}, {transform_indices = @transform_1, window_bounds = array<i64: 16, 16>}, {pipeline_mode = #tpu.pipeline_mode<synchronous>, transform_indices = @transform_2, window_bounds = array<i64: 1, 16>}, {pipeline_mode = #tpu.pipeline_mode<synchronous>, transform_indices = @transform_3, window_bounds = array<i64: 1, 16>}, {pipeline_mode = #tpu.pipeline_mode<synchronous>, transform_indices = @transform_4, window_bounds = array<i64: 3, 512>}, {pipeline_mode = #tpu.pipeline_mode<synchronous>, transform_indices = @transform_5, window_bounds = array<i64: 1, 512>}, {pipeline_mode = #tpu.pipeline_mode<synchronous>, transform_indices = @transform_6, window_bounds = array<i64: 16, 128>}, {pipeline_mode = #tpu.pipeline_mode<synchronous>, transform_indices = @transform_7, window_bounds = array<i64: 1, 128>}, {pipeline_mode = #tpu.pipeline_mode<synchronous>, transform_indices = @transform_8, window_bounds = array<i64: 128, 128>}, {pipeline_mode = #tpu.pipeline_mode<synchronous>, transform_indices = @transform_9, window_bounds = array<i64: 1, 128>}, {pipeline_mode = #tpu.pipeline_mode<synchronous>, transform_indices = @transform_10, window_bounds = array<i64: 512, 256>}, {pipeline_mode = #tpu.pipeline_mode<synchronous>, transform_indices = @transform_11, window_bounds = array<i64: 128, 256>}, {pipeline_mode = #tpu.pipeline_mode<synchronous>, transform_indices = @transform_12, window_bounds = array<i64: 1, 256>}, {pipeline_mode = #tpu.pipeline_mode<synchronous>, transform_indices = @transform_13, window_bounds = array<i64: 256, 128>}, {pipeline_mode = #tpu.pipeline_mode<synchronous>, transform_indices = @transform_14, window_bounds = array<i64: 1, 128>}, {transform_indices = @transform_15, window_bounds = array<i64: 16, 128>}]} {
    %c0 = arith.constant 0 : index
    %c0_0 = arith.constant 0 : index
    %0 = vector.load %arg1[%c0, %c0_0] : memref<16x3xbf16, #tpu.memory_space<vmem>>, vector<16x3xbf16>
    %c0_1 = arith.constant 0 : index
    %c0_2 = arith.constant 0 : index
    %1 = vector.load %arg5[%c0_1, %c0_2] : memref<3x512xbf16, #tpu.memory_space<vmem>>, vector<3x512xbf16>
    %cst = arith.constant dense<0.000000e+00> : vector<16x512xf32>
    %2 = tpu.matmul %0, %1, %cst {dimension_numbers = #tpu.dot_dimension_numbers<[1], [0], [0], [1], [0, 0, 1, 1], [], []>} : vector<16x3xbf16>, vector<3x512xbf16>, vector<16x512xf32> -> vector<16x512xf32>
    %c0_3 = arith.constant 0 : index
    %c0_4 = arith.constant 0 : index
    %3 = vector.load %arg6[%c0_3, %c0_4] : memref<1x512xf32, #tpu.memory_space<vmem>>, vector<1x512xf32>
    %4 = vector.broadcast %3 : vector<1x512xf32> to vector<16x512xf32>
    %5 = arith.addf %2, %4 : vector<16x512xf32>
    %cst_5 = arith.constant 0.000000e+00 : f32
    %6 = vector.broadcast %cst_5 : f32 to vector<16x512xf32>
    %7 = arith.maximumf %5, %6 : vector<16x512xf32>
    %c0_6 = arith.constant 0 : index
    %c0_7 = arith.constant 0 : index
    %8 = vector.load %arg2[%c0_6, %c0_7] : memref<16x16xf32, #tpu.memory_space<vmem>>, vector<16x16xf32>
    %c0_8 = arith.constant 0 : index
    %c0_9 = arith.constant 0 : index
    %9 = vector.load %arg3[%c0_8, %c0_9] : memref<1x16xf32, #tpu.memory_space<vmem>>, vector<1x16xf32>
    %10 = vector.broadcast %9 : vector<1x16xf32> to vector<16x16xf32>
    %11 = arith.mulf %8, %10 : vector<16x16xf32>
    %c0_10 = arith.constant 0 : index
    %c0_11 = arith.constant 0 : index
    %12 = vector.load %arg4[%c0_10, %c0_11] : memref<1x16xf32, #tpu.memory_space<vmem>>, vector<1x16xf32>
    %13 = vector.broadcast %12 : vector<1x16xf32> to vector<16x16xf32>
    %14 = arith.addf %11, %13 : vector<16x16xf32>
    %15 = arith.truncf %14 : vector<16x16xf32> to vector<16x16xbf16>
    %c0_12 = arith.constant 0 : index
    %c0_13 = arith.constant 0 : index
    %16 = vector.load %arg7[%c0_12, %c0_13] : memref<16x128xbf16, #tpu.memory_space<vmem>>, vector<16x128xbf16>
    %cst_14 = arith.constant dense<0.000000e+00> : vector<16x128xf32>
    %17 = tpu.matmul %15, %16, %cst_14 {dimension_numbers = #tpu.dot_dimension_numbers<[1], [0], [0], [1], [0, 0, 1, 1], [], []>} : vector<16x16xbf16>, vector<16x128xbf16>, vector<16x128xf32> -> vector<16x128xf32>
    %c0_15 = arith.constant 0 : index
    %c0_16 = arith.constant 0 : index
    %18 = vector.load %arg8[%c0_15, %c0_16] : memref<1x128xf32, #tpu.memory_space<vmem>>, vector<1x128xf32>
    %19 = vector.broadcast %18 : vector<1x128xf32> to vector<16x128xf32>
    %20 = arith.addf %17, %19 : vector<16x128xf32>
    %cst_17 = arith.constant 0.000000e+00 : f32
    %21 = vector.broadcast %cst_17 : f32 to vector<16x128xf32>
    %22 = arith.maximumf %20, %21 : vector<16x128xf32>
    %23 = arith.truncf %22 : vector<16x128xf32> to vector<16x128xbf16>
    %c0_18 = arith.constant 0 : index
    %c0_19 = arith.constant 0 : index
    %24 = vector.load %arg9[%c0_18, %c0_19] : memref<128x128xbf16, #tpu.memory_space<vmem>>, vector<128x128xbf16>
    %cst_20 = arith.constant dense<0.000000e+00> : vector<16x128xf32>
    %25 = tpu.matmul %23, %24, %cst_20 {dimension_numbers = #tpu.dot_dimension_numbers<[1], [0], [0], [1], [0, 0, 1, 1], [], []>} : vector<16x128xbf16>, vector<128x128xbf16>, vector<16x128xf32> -> vector<16x128xf32>
    %c0_21 = arith.constant 0 : index
    %c0_22 = arith.constant 0 : index
    %26 = vector.load %arg10[%c0_21, %c0_22] : memref<1x128xf32, #tpu.memory_space<vmem>>, vector<1x128xf32>
    %27 = vector.broadcast %26 : vector<1x128xf32> to vector<16x128xf32>
    %28 = arith.addf %25, %27 : vector<16x128xf32>
    %cst_23 = arith.constant 0.000000e+00 : f32
    %29 = vector.broadcast %cst_23 : f32 to vector<16x128xf32>
    %30 = arith.maximumf %28, %29 : vector<16x128xf32>
    %31 = arith.truncf %7 : vector<16x512xf32> to vector<16x512xbf16>
    %c0_24 = arith.constant 0 : index
    %c0_25 = arith.constant 0 : index
    %32 = vector.load %arg11[%c0_24, %c0_25] : memref<512x256xbf16, #tpu.memory_space<vmem>>, vector<512x256xbf16>
    %cst_26 = arith.constant dense<0.000000e+00> : vector<16x256xf32>
    %33 = tpu.matmul %31, %32, %cst_26 {dimension_numbers = #tpu.dot_dimension_numbers<[1], [0], [0], [1], [0, 0, 1, 1], [], []>} : vector<16x512xbf16>, vector<512x256xbf16>, vector<16x256xf32> -> vector<16x256xf32>
    %34 = arith.truncf %30 : vector<16x128xf32> to vector<16x128xbf16>
    %c0_27 = arith.constant 0 : index
    %c0_28 = arith.constant 0 : index
    %35 = vector.load %arg12[%c0_27, %c0_28] : memref<128x256xbf16, #tpu.memory_space<vmem>>, vector<128x256xbf16>
    %cst_29 = arith.constant dense<0.000000e+00> : vector<16x256xf32>
    %36 = tpu.matmul %34, %35, %cst_29 {dimension_numbers = #tpu.dot_dimension_numbers<[1], [0], [0], [1], [0, 0, 1, 1], [], []>} : vector<16x128xbf16>, vector<128x256xbf16>, vector<16x256xf32> -> vector<16x256xf32>
    %37 = arith.addf %33, %36 : vector<16x256xf32>
    %c0_30 = arith.constant 0 : index
    %c0_31 = arith.constant 0 : index
    %38 = vector.load %arg13[%c0_30, %c0_31] : memref<1x256xf32, #tpu.memory_space<vmem>>, vector<1x256xf32>
    %39 = vector.broadcast %38 : vector<1x256xf32> to vector<16x256xf32>
    %40 = arith.addf %37, %39 : vector<16x256xf32>
    %cst_32 = arith.constant 0.000000e+00 : f32
    %41 = vector.broadcast %cst_32 : f32 to vector<16x256xf32>
    %42 = arith.maximumf %40, %41 : vector<16x256xf32>
    %43 = arith.truncf %42 : vector<16x256xf32> to vector<16x256xbf16>
    %c0_33 = arith.constant 0 : index
    %c0_34 = arith.constant 0 : index
    %44 = vector.load %arg14[%c0_33, %c0_34] : memref<256x128xbf16, #tpu.memory_space<vmem>>, vector<256x128xbf16>
    %cst_35 = arith.constant dense<0.000000e+00> : vector<16x128xf32>
    %45 = tpu.matmul %43, %44, %cst_35 {dimension_numbers = #tpu.dot_dimension_numbers<[1], [0], [0], [1], [0, 0, 1, 1], [], []>} : vector<16x256xbf16>, vector<256x128xbf16>, vector<16x128xf32> -> vector<16x128xf32>
    %c0_36 = arith.constant 0 : index
    %c0_37 = arith.constant 0 : index
    %46 = vector.load %arg15[%c0_36, %c0_37] : memref<1x128xf32, #tpu.memory_space<vmem>>, vector<1x128xf32>
    %47 = vector.broadcast %46 : vector<1x128xf32> to vector<16x128xf32>
    %48 = arith.addf %45, %47 : vector<16x128xf32>
    %c0_38 = arith.constant 0 : index
    %c0_39 = arith.constant 0 : index
    %49 = vector.load %arg16[%c0_38, %c0_39] : memref<16x128xf32, #tpu.memory_space<vmem>>, vector<16x128xf32>
    tpu.vector_store %arg16[%c0_38, %c0_39], %48 {strides = array<i32>} : memref<16x128xf32, #tpu.memory_space<vmem>>, vector<16x128xf32>,
    return
  }
  func.func @transform_0(%arg0: i32) -> (i32, i32) {
    %c0_i32 = arith.constant 0 : i32
    %c0_i32_0 = arith.constant 0 : i32
    return %arg0, %c0_i32 : i32, i32
  }
  func.func @transform_1(%arg0: i32) -> (i32, i32) {
    %c0_i32 = arith.constant 0 : i32
    %c0_i32_0 = arith.constant 0 : i32
    return %arg0, %c0_i32 : i32, i32
  }
  func.func @transform_2(%arg0: i32) -> (i32, i32) {
    %c0_i32 = arith.constant 0 : i32
    %c0_i32_0 = arith.constant 0 : i32
    %c0_i32_1 = arith.constant 0 : i32
    return %c0_i32, %c0_i32_0 : i32, i32
  }
  func.func @transform_3(%arg0: i32) -> (i32, i32) {
    %c0_i32 = arith.constant 0 : i32
    %c0_i32_0 = arith.constant 0 : i32
    %c0_i32_1 = arith.constant 0 : i32
    return %c0_i32, %c0_i32_0 : i32, i32
  }
  func.func @transform_4(%arg0: i32) -> (i32, i32) {
    %c0_i32 = arith.constant 0 : i32
    %c0_i32_0 = arith.constant 0 : i32
    %c0_i32_1 = arith.constant 0 : i32
    return %c0_i32, %c0_i32_0 : i32, i32
  }
  func.func @transform_5(%arg0: i32) -> (i32, i32) {
    %c0_i32 = arith.constant 0 : i32
    %c0_i32_0 = arith.constant 0 : i32
    %c0_i32_1 = arith.constant 0 : i32
    return %c0_i32, %c0_i32_0 : i32, i32
  }
  func.func @transform_6(%arg0: i32) -> (i32, i32) {
    %c0_i32 = arith.constant 0 : i32
    %c0_i32_0 = arith.constant 0 : i32
    %c0_i32_1 = arith.constant 0 : i32
    return %c0_i32, %c0_i32_0 : i32, i32
  }
  func.func @transform_7(%arg0: i32) -> (i32, i32) {
    %c0_i32 = arith.constant 0 : i32
    %c0_i32_0 = arith.constant 0 : i32
    %c0_i32_1 = arith.constant 0 : i32
    return %c0_i32, %c0_i32_0 : i32, i32
  }
  func.func @transform_8(%arg0: i32) -> (i32, i32) {
    %c0_i32 = arith.constant 0 : i32
    %c0_i32_0 = arith.constant 0 : i32
    %c0_i32_1 = arith.constant 0 : i32
    return %c0_i32, %c0_i32_0 : i32, i32
  }
  func.func @transform_9(%arg0: i32) -> (i32, i32) {
    %c0_i32 = arith.constant 0 : i32
    %c0_i32_0 = arith.constant 0 : i32
    %c0_i32_1 = arith.constant 0 : i32
    return %c0_i32, %c0_i32_0 : i32, i32
  }
  func.func @transform_10(%arg0: i32) -> (i32, i32) {
    %c0_i32 = arith.constant 0 : i32
    %c0_i32_0 = arith.constant 0 : i32
    %c0_i32_1 = arith.constant 0 : i32
    return %c0_i32, %c0_i32_0 : i32, i32
  }
  func.func @transform_11(%arg0: i32) -> (i32, i32) {
    %c0_i32 = arith.constant 0 : i32
    %c0_i32_0 = arith.constant 0 : i32
    %c0_i32_1 = arith.constant 0 : i32
    return %c0_i32, %c0_i32_0 : i32, i32
  }
  func.func @transform_12(%arg0: i32) -> (i32, i32) {
    %c0_i32 = arith.constant 0 : i32
    %c0_i32_0 = arith.constant 0 : i32
    %c0_i32_1 = arith.constant 0 : i32
    return %c0_i32, %c0_i32_0 : i32, i32
  }
  func.func @transform_13(%arg0: i32) -> (i32, i32) {
    %c0_i32 = arith.constant 0 : i32
    %c0_i32_0 = arith.constant 0 : i32
    %c0_i32_1 = arith.constant 0 : i32
    return %c0_i32, %c0_i32_0 : i32, i32
  }
  func.func @transform_14(%arg0: i32) -> (i32, i32) {
    %c0_i32 = arith.constant 0 : i32
    %c0_i32_0 = arith.constant 0 : i32
    %c0_i32_1 = arith.constant 0 : i32
    return %c0_i32, %c0_i32_0 : i32, i32
  }
  func.func @transform_15(%arg0: i32) -> (i32, i32) {
    %c0_i32 = arith.constant 0 : i32
    %c0_i32_0 = arith.constant 0 : i32
    return %arg0, %c0_i32 : i32, i32
  }
}

</mosaic_0001>

<llo_original>
// kernel: combined_model_forward.1
$region0: #{combined_model_forward.1}
  #allocation0 [shape = 'u32[]', space=smem, size = 0x4, offset = 0x4, fixed_abs, tag = 'smem constant byte address 0x4 - core index']
  #allocation1 [shape = 'u32[144,128]{1,0:T(1,128)}', space=vmem, size = 0x12000, scoped, tag = 'internal scratch']
  %s0 = inlined_call_operand.vmem [shape: bf16[16,3], index: 0, kind: input, shape index: {}]
  %s1 = inlined_call_operand.vmem [shape: f32[16,16], index: 1, kind: input, shape index: {}]
  %s2 = inlined_call_operand.vmem [shape: f32[1,16], index: 2, kind: input, shape index: {}]
  %s3 = inlined_call_operand.vmem [shape: f32[1,16], index: 3, kind: input, shape index: {}]
  %s4 = inlined_call_operand.vmem [shape: bf16[3,512], index: 4, kind: input, shape index: {}]
  %s5 = inlined_call_operand.vmem [shape: f32[1,512], index: 5, kind: input, shape index: {}]
  %s6 = inlined_call_operand.vmem [shape: bf16[16,128], index: 6, kind: input, shape index: {}]
  %s7 = inlined_call_operand.vmem [shape: f32[1,128], index: 7, kind: input, shape index: {}]
  %s8 = inlined_call_operand.vmem [shape: bf16[128,128], index: 8, kind: input, shape index: {}]
  %s9 = inlined_call_operand.vmem [shape: f32[1,128], index: 9, kind: input, shape index: {}]
  %s10 = inlined_call_operand.hbm [shape: bf16[512,256], index: 10, kind: input, shape index: {}]
  %s11 = inlined_call_operand.vmem [shape: bf16[128,256], index: 11, kind: input, shape index: {}]
  %s12 = inlined_call_operand.vmem [shape: f32[1,256], index: 12, kind: input, shape index: {}]
  %s13 = inlined_call_operand.vmem [shape: bf16[256,128], index: 13, kind: input, shape index: {}]
  %s14 = inlined_call_operand.vmem [shape: f32[1,128], index: 14, kind: input, shape index: {}]
  %s15 = inlined_call_operand.vmem [shape: f32[16,128], index: 15, kind: output, shape index: {}]
  %s16 = sld [smem:[#allocation0]]
  $region74: #{combined_model_forward.1} parent=0
    _
  %s18 = ssub.s32 1, %s16
  %s19 = scalar_select 0, %s18, %s16
  $region1: #{combined_model_forward.1} parent=0
    #allocation2 [shape = 'u8[262144]{0}', space=vmem, size = 0x40000, scoped, tag = 'input window, operand 10, single buffered']
    #allocation3 [shape = 's32[1]{0}', space=sflag, size = 0x4, scoped, tag = 'scoped memory for combined_model_forward.1']
    %20 = vsyncpa [#allocation3], 0
    // Predicated region
    $region2: #{combined_model_forward.1} parent=1 // pred_check
      _
    $region3: #{combined_model_forward.1} parent=1 // pred_check_branch
      %22 = sbr.rel (0) target = $region5
    $region4: #{combined_model_forward.1} parent=1 // pred_region
      _
    $region5: #{combined_model_forward.1} parent=1 // pred_fallthru
      _
    // Predicated region
    $region6: #{combined_model_forward.1} parent=1 // pred_check
      _
    $region7: #{combined_model_forward.1} parent=1 // pred_check_branch
      %24 = sbr.rel (0) target = $region9
    $region8: #{combined_model_forward.1} parent=1 // pred_region
      _
    $region9: #{combined_model_forward.1} parent=1 // pred_fallthru
      _
    // Predicated region
    $region10: #{combined_model_forward.1} parent=1 // pred_check
      _
    $region11: #{combined_model_forward.1} parent=1 // pred_check_branch
      %26 = sbr.rel (0) target = $region13
    $region12: #{combined_model_forward.1} parent=1 // pred_region
      _
    $region13: #{combined_model_forward.1} parent=1 // pred_fallthru
      _
    // Predicated region
    $region14: #{combined_model_forward.1} parent=1 // pred_check
      _
    $region15: #{combined_model_forward.1} parent=1 // pred_check_branch
      %28 = sbr.rel (0) target = $region17
    $region16: #{combined_model_forward.1} parent=1 // pred_region
      _
    $region17: #{combined_model_forward.1} parent=1 // pred_fallthru
      _
    // Predicated region
    $region18: #{combined_model_forward.1} parent=1 // pred_check
      _
    $region19: #{combined_model_forward.1} parent=1 // pred_check_branch
      %30 = sbr.rel (0) target = $region21
    $region20: #{combined_model_forward.1} parent=1 // pred_region
      _
    $region21: #{combined_model_forward.1} parent=1 // pred_fallthru
      _
    // Predicated region
    $region22: #{combined_model_forward.1} parent=1 // pred_check
      _
    $region23: #{combined_model_forward.1} parent=1 // pred_check_branch
      %32 = sbr.rel (0) target = $region25
    $region24: #{combined_model_forward.1} parent=1 // pred_region
      _
    $region25: #{combined_model_forward.1} parent=1 // pred_fallthru
      _
    // Predicated region
    $region26: #{combined_model_forward.1} parent=1 // pred_check
      _
    $region27: #{combined_model_forward.1} parent=1 // pred_check_branch
      %34 = sbr.rel (0) target = $region29
    $region28: #{combined_model_forward.1} parent=1 // pred_region
      _
    $region29: #{combined_model_forward.1} parent=1 // pred_fallthru
      _
    // Predicated region
    $region30: #{combined_model_forward.1} parent=1 // pred_check
      _
    $region31: #{combined_model_forward.1} parent=1 // pred_check_branch
      %36 = sbr.rel (0) target = $region33
    $region32: #{combined_model_forward.1} parent=1 // pred_region
      _
    $region33: #{combined_model_forward.1} parent=1 // pred_fallthru
      _
    // Predicated region
    $region34: #{combined_model_forward.1} parent=1 // pred_check
      _
    $region35: #{combined_model_forward.1} parent=1 // pred_check_branch
      %38 = sbr.rel (0) target = $region37
    $region36: #{combined_model_forward.1} parent=1 // pred_region
      _
    $region37: #{combined_model_forward.1} parent=1 // pred_fallthru
      _
    // Predicated region
    $region38: #{combined_model_forward.1} parent=1 // pred_check
      _
    $region39: #{combined_model_forward.1} parent=1 // pred_check_branch
      %40 = sbr.rel (0) target = $region41
    $region40: #{combined_model_forward.1} parent=1 // pred_region
      _
    $region41: #{combined_model_forward.1} parent=1 // pred_fallthru
      _
    // Predicated region
    $region42: #{combined_model_forward.1} parent=1 // pred_check
      _
    $region43: #{combined_model_forward.1} parent=1 // pred_check_branch
      %42 = sbr.rel (0) target = $region45
    $region44: #{combined_model_forward.1} parent=1 // pred_region
      %s44 = ssub.s32 8192, 8192
      %45 = vsyncadd [#allocation3], %s44
      %s46 = sshll.u32 [#allocation2], 4
      %s47 = int_to_ptr.vmem [resolvable:$true] %s46
      %52 = dma.hbm_to_vmem [thread:$0]  %s10, 8192, %s47, [#allocation3], 128, 128, 8
    $region45: #{combined_model_forward.1} parent=1 // pred_fallthru
      _
    // Predicated region
    $region46: #{combined_model_forward.1} parent=1 // pred_check
      _
    $region47: #{combined_model_forward.1} parent=1 // pred_check_branch
      %54 = sbr.rel (0) target = $region49
    $region48: #{combined_model_forward.1} parent=1 // pred_region
      _
    $region49: #{combined_model_forward.1} parent=1 // pred_fallthru
      _
    // Predicated region
    $region50: #{combined_model_forward.1} parent=1 // pred_check
      _
    $region51: #{combined_model_forward.1} parent=1 // pred_check_branch
      %56 = sbr.rel (0) target = $region53
    $region52: #{combined_model_forward.1} parent=1 // pred_region
      _
    $region53: #{combined_model_forward.1} parent=1 // pred_fallthru
      _
    // Predicated region
    $region54: #{combined_model_forward.1} parent=1 // pred_check
      _
    $region55: #{combined_model_forward.1} parent=1 // pred_check_branch
      %58 = sbr.rel (0) target = $region57
    $region56: #{combined_model_forward.1} parent=1 // pred_region
      _
    $region57: #{combined_model_forward.1} parent=1 // pred_fallthru
      _
    // Predicated region
    $region58: #{combined_model_forward.1} parent=1 // pred_check
      _
    $region59: #{combined_model_forward.1} parent=1 // pred_check_branch
      %60 = sbr.rel (0) target = $region61
    $region60: #{combined_model_forward.1} parent=1 // pred_region
      _
    $region61: #{combined_model_forward.1} parent=1 // pred_fallthru
      _
    // Predicated region
    $region62: #{combined_model_forward.1} parent=1 // pred_check
      _
    $region63: #{combined_model_forward.1} parent=1 // pred_check_branch
      %62 = sbr.rel (0) target = $region65
    $region64: #{combined_model_forward.1} parent=1 // pred_region
      %63 = dma.done [#allocation3], 8192
    $region65: #{combined_model_forward.1} parent=1 // pred_fallthru
      _
    %v65 = vld [vmem:[%s0] sm:$0xf]
    %v66 = vld [vmem:[%s0 + $0x4] sm:$0xf]
    %v67 = vld [vmem:[%s4] sm:$0xff]
    %v68 = vld [vmem:[%s5] sm:$0xf]
    %v70 = vlaneseq
    %v71 = vshrl.u32 %v70, 7
    %v72 = vsub.s32 0, %v71
    %v73 = vrot.slane %v68, %v72
    %v74 = vlaneseq
    %v75 = vshrl.u32 %v74, 7
    %v76 = vsub.s32 1, %v75
    %v77 = vrot.slane %v68, %v76
    %v78 = vlaneseq
    %v79 = vshrl.u32 %v78, 7
    %v80 = vsub.s32 2, %v79
    %v81 = vrot.slane %v68, %v80
    %v82 = vlaneseq
    %v83 = vshrl.u32 %v82, 7
    %v84 = vsub.s32 3, %v83
    %v85 = vrot.slane %v68, %v84
    %v92 = vunpack.c.l.b16 %v65
    %v93 = vunpack.c.l.b16 %v66
    %v94 = vpack.c.b16 %v93, %v92
    %v96 = vcombine.high %v67, %v67
    %v98 = vunpack.c.l.s4 1983009808
    %v99 = vunpack.c.0.s8 %v98
    %v100 = vlaneseq
    %v101 = vshrl.u32 %v100, 7
    %v102 = vsub.s32 %v99, %v101
    %v103 = vrot.slane %v67, %v102
    %v105 = vunpack.c.l.s4 1983009808
    %v106 = vunpack.c.0.s8 %v105
    %v107 = vlaneseq
    %v108 = vshrl.u32 %v107, 7
    %v109 = vsub.s32 %v106, %v108
    %v110 = vrot.slane %v96, %v109
    %v111 = vcombine.high %v103, %v103
    %v112 = vcombine.high %v110, %v110
    %vm113 = vcmask 23552
    %v115 = vsel %vm113, %v94, 0
    %vm117 = vcmask 1040384
    %vm118 = vcmask 1041408
    %v119 = vsel %vm117, 4294967295, 65535
    %v120 = vsel %vm118, %v119, 0
    %v122 = vand.u32 %v103, %v120
    %v125 = vand.u32 %v111, %v120
    %v128 = vand.u32 %v110, %v120
    %v131 = vand.u32 %v112, %v120
    %133 = vmatprep.subr.bf16.mxu0 0
    %134 = vmatpush1.bf16.msra.mxu0 0
    %135 = vmatprep.subr.bf16.mxu0 0
    %136 = vmatpush1.bf16.msra.mxu0 0
    %137 = vmatprep.subr.bf16.mxu0 0
    %138 = vmatpush1.bf16.msra.mxu0 0
    %139 = vmatprep.subr.bf16.mxu0 0
    %140 = vmatpush1.bf16.msra.mxu0 0
    %141 = vmatprep.subr.bf16.mxu0 0
    %142 = vmatpush1.bf16.msra.mxu0 0
    %143 = vmatprep.subr.bf16.mxu0 0
    %144 = vmatpush1.bf16.msra.mxu0 0
    %145 = vmatprep.subr.bf16.mxu0 0
    %146 = vmatpush1.bf16.msra.mxu0 0
    %147 = vmatprep.subr.bf16.mxu0 %v125
    %148 = vmatpush1.bf16.msra.mxu0 %v122
    %149 = vmatprep.subr.bf16.mxu0 0
    %150 = vmatpush2.bf16.msra.mxu0 0
    %151 = vmatprep.subr.bf16.mxu0 0
    %152 = vmatpush2.bf16.msra.mxu0 0
    %153 = vmatprep.subr.bf16.mxu0 0
    %154 = vmatpush2.bf16.msra.mxu0 0
    %155 = vmatprep.subr.bf16.mxu0 0
    %156 = vmatpush2.bf16.msra.mxu0 0
    %157 = vmatprep.subr.bf16.mxu0 0
    %158 = vmatpush2.bf16.msra.mxu0 0
    %159 = vmatprep.subr.bf16.mxu0 0
    %160 = vmatpush2.bf16.msra.mxu0 0
    %161 = vmatprep.subr.bf16.mxu0 0
    %162 = vmatpush2.bf16.msra.mxu0 0
    %163 = vmatprep.subr.bf16.mxu0 0
    %164 = vmatpush2.bf16.msra.mxu0 0
    %165 = vmatprep.mubr.bf16.mxu0 0
    %166 = vmatmul.mubr.bf16.gmra.mxu0 %v115
    %v167 = vpop.f32.mrf.mxu0
    %v168 = vadd.f32 %v73, %v167
    %v169 = vpop.f32.mrf.mxu0
    %v170 = vadd.f32 %v77, %v169
    %v171 = vpop.f32.mrf.mxu0
    %v172 = vadd.f32 %v73, %v171
    %v173 = vpop.f32.mrf.mxu0
    %v174 = vadd.f32 %v77, %v173
    %175 = vdwg.mxu0
    %176 = vmatprep.subr.bf16.mxu0 0
    %177 = vmatpush1.bf16.msra.mxu0 0
    %178 = vmatprep.subr.bf16.mxu0 0
    %179 = vmatpush1.bf16.msra.mxu0 0
    %180 = vmatprep.subr.bf16.mxu0 0
    %181 = vmatpush1.bf16.msra.mxu0 0
    %182 = vmatprep.subr.bf16.mxu0 0
    %183 = vmatpush1.bf16.msra.mxu0 0
    %184 = vmatprep.subr.bf16.mxu0 0
    %185 = vmatpush1.bf16.msra.mxu0 0
    %186 = vmatprep.subr.bf16.mxu0 0
    %187 = vmatpush1.bf16.msra.mxu0 0
    %188 = vmatprep.subr.bf16.mxu0 0
    %189 = vmatpush1.bf16.msra.mxu0 0
    %190 = vmatprep.subr.bf16.mxu0 %v131
    %191 = vmatpush1.bf16.msra.mxu0 %v128
    %192 = vmatprep.subr.bf16.mxu0 0
    %193 = vmatpush2.bf16.msra.mxu0 0
    %194 = vmatprep.subr.bf16.mxu0 0
    %195 = vmatpush2.bf16.msra.mxu0 0
    %196 = vmatprep.subr.bf16.mxu0 0
    %197 = vmatpush2.bf16.msra.mxu0 0
    %198 = vmatprep.subr.bf16.mxu0 0
    %199 = vmatpush2.bf16.msra.mxu0 0
    %200 = vmatprep.subr.bf16.mxu0 0
    %201 = vmatpush2.bf16.msra.mxu0 0
    %202 = vmatprep.subr.bf16.mxu0 0
    %203 = vmatpush2.bf16.msra.mxu0 0
    %204 = vmatprep.subr.bf16.mxu0 0
    %205 = vmatpush2.bf16.msra.mxu0 0
    %206 = vmatprep.subr.bf16.mxu0 0
    %207 = vmatpush2.bf16.msra.mxu0 0
    %208 = vmatprep.mubr.bf16.mxu0 0
    %209 = vmatmul.mubr.bf16.gmra.mxu0 %v115
    %v210 = vpop.f32.mrf.mxu0
    %v211 = vadd.f32 %v81, %v210
    %v212 = vpop.f32.mrf.mxu0
    %v213 = vadd.f32 %v85, %v212
    %v214 = vpop.f32.mrf.mxu0
    %v215 = vadd.f32 %v81, %v214
    %v216 = vpop.f32.mrf.mxu0
    %v217 = vadd.f32 %v85, %v216
    %218 = vdwg.mxu0
    %v219 = vmax.f32 %v168, 0.0
    %v220 = vmax.f32 %v170, 0.0
    %v221 = vmax.f32 %v211, 0.0
    %v222 = vmax.f32 %v213, 0.0
    %v223 = vmax.f32 %v172, 0.0
    %v224 = vmax.f32 %v174, 0.0
    %v225 = vmax.f32 %v215, 0.0
    %v226 = vmax.f32 %v217, 0.0
    %v227 = vld [vmem:[%s1] sm:$0xff]
    %v228 = vld [vmem:[%s1 + $0x8] sm:$0xff]
    %v229 = vld [vmem:[%s2] sm:$0x1]
    %v231 = vlaneseq
    %v232 = vshrl.u32 %v231, 7
    %v233 = vsub.s32 0, %v232
    %v234 = vrot.slane %v229, %v233
    %v236 = vmul.f32 %v227, %v234
    %v237 = vmul.f32 %v228, %v234
    %v238 = vld [vmem:[%s3] sm:$0x1]
    %v240 = vlaneseq
    %v241 = vshrl.u32 %v240, 7
    %v242 = vsub.s32 0, %v241
    %v243 = vrot.slane %v238, %v242
    %v245 = vadd.f32 %v236, %v243
    %v246 = vadd.f32 %v237, %v243
    %v247 = vpack.c.bf16 %v246, %v245
    %v248 = vld [vmem:[%s6] sm:$0xf]
    %v249 = vld [vmem:[%s6 + $0x4] sm:$0xf]
    %v250 = vld [vmem:[%s7] sm:$0x1]
    %v252 = vlaneseq
    %v253 = vshrl.u32 %v252, 7
    %v254 = vsub.s32 0, %v253
    %v255 = vrot.slane %v250, %v254
    %v259 = vunpack.c.l.b16 %v248
    %v260 = vunpack.c.l.b16 %v249
    %v261 = vpack.c.b16 %v260, %v259
    %vm263 = vcmask 130048
    %v265 = vsel %vm263, %v247, 0
    %267 = vmatprep.subr.bf16.mxu0 0
    %268 = vmatpush1.bf16.msra.mxu0 0
    %269 = vmatprep.subr.bf16.mxu0 0
    %270 = vmatpush1.bf16.msra.mxu0 0
    %271 = vmatprep.subr.bf16.mxu0 0
    %272 = vmatpush1.bf16.msra.mxu0 0
    %273 = vmatprep.subr.bf16.mxu0 0
    %274 = vmatpush1.bf16.msra.mxu0 0
    %275 = vmatprep.subr.bf16.mxu0 0
    %276 = vmatpush1.bf16.msra.mxu0 0
    %277 = vmatprep.subr.bf16.mxu0 0
    %278 = vmatpush1.bf16.msra.mxu0 0
    %279 = vmatprep.subr.bf16.mxu0 0
    %280 = vmatpush1.bf16.msra.mxu0 0
    %281 = vmatprep.subr.bf16.mxu0 0
    %282 = vmatpush1.bf16.msra.mxu0 %v261
    %283 = vmatprep.subr.bf16.mxu0 0
    %284 = vmatpush2.bf16.msra.mxu0 0
    %285 = vmatprep.subr.bf16.mxu0 0
    %286 = vmatpush2.bf16.msra.mxu0 0
    %287 = vmatprep.subr.bf16.mxu0 0
    %288 = vmatpush2.bf16.msra.mxu0 0
    %289 = vmatprep.subr.bf16.mxu0 0
    %290 = vmatpush2.bf16.msra.mxu0 0
    %291 = vmatprep.subr.bf16.mxu0 0
    %292 = vmatpush2.bf16.msra.mxu0 0
    %293 = vmatprep.subr.bf16.mxu0 0
    %294 = vmatpush2.bf16.msra.mxu0 0
    %295 = vmatprep.subr.bf16.mxu0 0
    %296 = vmatpush2.bf16.msra.mxu0 0
    %297 = vmatprep.subr.bf16.mxu0 0
    %298 = vmatpush2.bf16.msra.mxu0 0
    %299 = vmatprep.mubr.bf16.mxu0 0
    %300 = vmatmul.mubr.bf16.gmra.mxu0 %v265
    %v301 = vpop.f32.mrf.mxu0
    %v302 = vadd.f32 %v255, %v301
    %v303 = vpop.f32.mrf.mxu0
    %v304 = vpop.f32.mrf.mxu0
    %v305 = vadd.f32 %v255, %v304
    %v306 = vpop.f32.mrf.mxu0
    %307 = vdwg.mxu0
    %v308 = vmax.f32 %v302, 0.0
    %v309 = vmax.f32 %v305, 0.0
    %v310 = vpack.c.bf16 %v309, %v308
    %v311 = vld [vmem:[%s8] sm:$0xf]
    %v312 = vld [vmem:[%s8 + $0x4] sm:$0xf]
    %v313 = vld [vmem:[%s8 + $0x8] sm:$0xf]
    %v314 = vld [vmem:[%s8 + $0xc] sm:$0xf]
    %v315 = vld [vmem:[%s8 + $0x10] sm:$0xf]
    %v316 = vld [vmem:[%s8 + $0x14] sm:$0xf]
    %v317 = vld [vmem:[%s8 + $0x18] sm:$0xf]
    %v318 = vld [vmem:[%s8 + $0x1c] sm:$0xf]
    %v319 = vld [vmem:[%s8 + $0x20] sm:$0xf]
    %v320 = vld [vmem:[%s8 + $0x24] sm:$0xf]
    %v321 = vld [vmem:[%s8 + $0x28] sm:$0xf]
    %v322 = vld [vmem:[%s8 + $0x2c] sm:$0xf]
    %v323 = vld [vmem:[%s8 + $0x30] sm:$0xf]
    %v324 = vld [vmem:[%s8 + $0x34] sm:$0xf]
    %v325 = vld [vmem:[%s8 + $0x38] sm:$0xf]
    %v326 = vld [vmem:[%s8 + $0x3c] sm:$0xf]
    %v327 = vld [vmem:[%s9] sm:$0x1]
    %v329 = vlaneseq
    %v330 = vshrl.u32 %v329, 7
    %v331 = vsub.s32 0, %v330
    %v332 = vrot.slane %v327, %v331
    %v350 = vunpack.c.l.b16 %v311
    %v351 = vunpack.c.l.b16 %v312
    %v352 = vunpack.c.l.b16 %v313
    %v353 = vunpack.c.l.b16 %v314
    %v354 = vunpack.c.l.b16 %v315
    %v355 = vunpack.c.l.b16 %v316
    %v356 = vunpack.c.l.b16 %v317
    %v357 = vunpack.c.l.b16 %v318
    %v358 = vunpack.c.l.b16 %v319
    %v359 = vunpack.c.l.b16 %v320
    %v360 = vunpack.c.l.b16 %v321
    %v361 = vunpack.c.l.b16 %v322
    %v362 = vunpack.c.l.b16 %v323
    %v363 = vunpack.c.l.b16 %v324
    %v364 = vunpack.c.l.b16 %v325
    %v365 = vunpack.c.l.b16 %v326
    %v366 = vpack.c.b16 %v351, %v350
    %v367 = vpack.c.b16 %v353, %v352
    %v368 = vpack.c.b16 %v355, %v354
    %v369 = vpack.c.b16 %v357, %v356
    %v370 = vpack.c.b16 %v359, %v358
    %v371 = vpack.c.b16 %v361, %v360
    %v372 = vpack.c.b16 %v363, %v362
    %v373 = vpack.c.b16 %v365, %v364
    %382 = vmatprep.subr.bf16.mxu0 0
    %383 = vmatpush1.bf16.msra.mxu0 %v373
    %384 = vmatprep.subr.bf16.mxu0 0
    %385 = vmatpush1.bf16.msra.mxu0 %v372
    %386 = vmatprep.subr.bf16.mxu0 0
    %387 = vmatpush1.bf16.msra.mxu0 %v371
    %388 = vmatprep.subr.bf16.mxu0 0
    %389 = vmatpush1.bf16.msra.mxu0 %v370
    %390 = vmatprep.subr.bf16.mxu0 0
    %391 = vmatpush1.bf16.msra.mxu0 %v369
    %392 = vmatprep.subr.bf16.mxu0 0
    %393 = vmatpush1.bf16.msra.mxu0 %v368
    %394 = vmatprep.subr.bf16.mxu0 0
    %395 = vmatpush1.bf16.msra.mxu0 %v367
    %396 = vmatprep.subr.bf16.mxu0 0
    %397 = vmatpush1.bf16.msra.mxu0 %v366
    %398 = vmatprep.subr.bf16.mxu0 0
    %399 = vmatpush2.bf16.msra.mxu0 0
    %400 = vmatprep.subr.bf16.mxu0 0
    %401 = vmatpush2.bf16.msra.mxu0 0
    %402 = vmatprep.subr.bf16.mxu0 0
    %403 = vmatpush2.bf16.msra.mxu0 0
    %404 = vmatprep.subr.bf16.mxu0 0
    %405 = vmatpush2.bf16.msra.mxu0 0
    %406 = vmatprep.subr.bf16.mxu0 0
    %407 = vmatpush2.bf16.msra.mxu0 0
    %408 = vmatprep.subr.bf16.mxu0 0
    %409 = vmatpush2.bf16.msra.mxu0 0
    %410 = vmatprep.subr.bf16.mxu0 0
    %411 = vmatpush2.bf16.msra.mxu0 0
    %412 = vmatprep.subr.bf16.mxu0 0
    %413 = vmatpush2.bf16.msra.mxu0 0
    %414 = vmatprep.mubr.bf16.mxu0 0
    %415 = vmatmul.mubr.bf16.gmra.mxu0 %v310
    %v416 = vpop.f32.mrf.mxu0
    %v417 = vadd.f32 %v332, %v416
    %v418 = vpop.f32.mrf.mxu0
    %v419 = vpop.f32.mrf.mxu0
    %v420 = vadd.f32 %v332, %v419
    %v421 = vpop.f32.mrf.mxu0
    %422 = vdwg.mxu0
    %v423 = vmax.f32 %v417, 0.0
    %v424 = vmax.f32 %v420, 0.0
    %v425 = vpack.c.bf16 %v223, %v219
    %v426 = vpack.c.bf16 %v224, %v220
    %v427 = vpack.c.bf16 %v225, %v221
    %v428 = vpack.c.bf16 %v226, %v222
    %v429 = vld [vmem:[#allocation2] sm:$0xff]
    %v430 = vld [vmem:[#allocation2 + $0x8] sm:$0xff]
    %v431 = vld [vmem:[#allocation2 + $0x10] sm:$0xff]
    %v432 = vld [vmem:[#allocation2 + $0x18] sm:$0xff]
    %v433 = vld [vmem:[#allocation2 + $0x20] sm:$0xff]
    %v434 = vld [vmem:[#allocation2 + $0x28] sm:$0xff]
    %v435 = vld [vmem:[#allocation2 + $0x30] sm:$0xff]
    %v436 = vld [vmem:[#allocation2 + $0x38] sm:$0xff]
    %v437 = vld [vmem:[#allocation2 + $0x40] sm:$0xff]
    %v438 = vld [vmem:[#allocation2 + $0x48] sm:$0xff]
    %v439 = vld [vmem:[#allocation2 + $0x50] sm:$0xff]
    %v440 = vld [vmem:[#allocation2 + $0x58] sm:$0xff]
    %v441 = vld [vmem:[#allocation2 + $0x60] sm:$0xff]
    %v442 = vld [vmem:[#allocation2 + $0x68] sm:$0xff]
    %v443 = vld [vmem:[#allocation2 + $0x70] sm:$0xff]
    %v444 = vld [vmem:[#allocation2 + $0x78] sm:$0xff]
    %v445 = vld [vmem:[#allocation2 + $0x80] sm:$0xff]
    %v446 = vld [vmem:[#allocation2 + $0x88] sm:$0xff]
    %v447 = vld [vmem:[#allocation2 + $0x90] sm:$0xff]
    %v448 = vld [vmem:[#allocation2 + $0x98] sm:$0xff]
    %v449 = vld [vmem:[#allocation2 + $0xa0] sm:$0xff]
    %v450 = vld [vmem:[#allocation2 + $0xa8] sm:$0xff]
    %v451 = vld [vmem:[#allocation2 + $0xb0] sm:$0xff]
    %v452 = vld [vmem:[#allocation2 + $0xb8] sm:$0xff]
    %v453 = vld [vmem:[#allocation2 + $0xc0] sm:$0xff]
    %v454 = vld [vmem:[#allocation2 + $0xc8] sm:$0xff]
    %v455 = vld [vmem:[#allocation2 + $0xd0] sm:$0xff]
    %v456 = vld [vmem:[#allocation2 + $0xd8] sm:$0xff]
    %v457 = vld [vmem:[#allocation2 + $0xe0] sm:$0xff]
    %v458 = vld [vmem:[#allocation2 + $0xe8] sm:$0xff]
    %v459 = vld [vmem:[#allocation2 + $0xf0] sm:$0xff]
    %v460 = vld [vmem:[#allocation2 + $0xf8] sm:$0xff]
    %v461 = vld [vmem:[#allocation2 + $0x100] sm:$0xff]
    %v462 = vld [vmem:[#allocation2 + $0x108] sm:$0xff]
    %v463 = vld [vmem:[#allocation2 + $0x110] sm:$0xff]
    %v464 = vld [vmem:[#allocation2 + $0x118] sm:$0xff]
    %v465 = vld [vmem:[#allocation2 + $0x120] sm:$0xff]
    %v466 = vld [vmem:[#allocation2 + $0x128] sm:$0xff]
    %v467 = vld [vmem:[#allocation2 + $0x130] sm:$0xff]
    %v468 = vld [vmem:[#allocation2 + $0x138] sm:$0xff]
    %v469 = vld [vmem:[#allocation2 + $0x140] sm:$0xff]
    %v470 = vld [vmem:[#allocation2 + $0x148] sm:$0xff]
    %v471 = vld [vmem:[#allocation2 + $0x150] sm:$0xff]
    %v472 = vld [vmem:[#allocation2 + $0x158] sm:$0xff]
    %v473 = vld [vmem:[#allocation2 + $0x160] sm:$0xff]
    %v474 = vld [vmem:[#allocation2 + $0x168] sm:$0xff]
    %v475 = vld [vmem:[#allocation2 + $0x170] sm:$0xff]
    %v476 = vld [vmem:[#allocation2 + $0x178] sm:$0xff]
    %v477 = vld [vmem:[#allocation2 + $0x180] sm:$0xff]
    %v478 = vld [vmem:[#allocation2 + $0x188] sm:$0xff]
    %v479 = vld [vmem:[#allocation2 + $0x190] sm:$0xff]
    %v480 = vld [vmem:[#allocation2 + $0x198] sm:$0xff]
    %v481 = vld [vmem:[#allocation2 + $0x1a0] sm:$0xff]
    %v482 = vld [vmem:[#allocation2 + $0x1a8] sm:$0xff]
    %v483 = vld [vmem:[#allocation2 + $0x1b0] sm:$0xff]
    %v484 = vld [vmem:[#allocation2 + $0x1b8] sm:$0xff]
    %v485 = vld [vmem:[#allocation2 + $0x1c0] sm:$0xff]
    %v486 = vld [vmem:[#allocation2 + $0x1c8] sm:$0xff]
    %v487 = vld [vmem:[#allocation2 + $0x1d0] sm:$0xff]
    %v488 = vld [vmem:[#allocation2 + $0x1d8] sm:$0xff]
    %v489 = vld [vmem:[#allocation2 + $0x1e0] sm:$0xff]
    %v490 = vld [vmem:[#allocation2 + $0x1e8] sm:$0xff]
    %v491 = vld [vmem:[#allocation2 + $0x1f0] sm:$0xff]
    %v492 = vld [vmem:[#allocation2 + $0x1f8] sm:$0xff]
    %v493 = vpack.c.bf16 %v424, %v423
    %v494 = vld [vmem:[%s11] sm:$0xff]
    %v495 = vld [vmem:[%s11 + $0x8] sm:$0xff]
    %v496 = vld [vmem:[%s11 + $0x10] sm:$0xff]
    %v497 = vld [vmem:[%s11 + $0x18] sm:$0xff]
    %v498 = vld [vmem:[%s11 + $0x20] sm:$0xff]
    %v499 = vld [vmem:[%s11 + $0x28] sm:$0xff]
    %v500 = vld [vmem:[%s11 + $0x30] sm:$0xff]
    %v501 = vld [vmem:[%s11 + $0x38] sm:$0xff]
    %v502 = vld [vmem:[%s11 + $0x40] sm:$0xff]
    %v503 = vld [vmem:[%s11 + $0x48] sm:$0xff]
    %v504 = vld [vmem:[%s11 + $0x50] sm:$0xff]
    %v505 = vld [vmem:[%s11 + $0x58] sm:$0xff]
    %v506 = vld [vmem:[%s11 + $0x60] sm:$0xff]
    %v507 = vld [vmem:[%s11 + $0x68] sm:$0xff]
    %v508 = vld [vmem:[%s11 + $0x70] sm:$0xff]
    %v509 = vld [vmem:[%s11 + $0x78] sm:$0xff]
    %v526 = vunpack.c.l.b16 %v494
    %v527 = vunpack.c.h.b16 %v494
    %v528 = vunpack.c.l.b16 %v495
    %v529 = vunpack.c.h.b16 %v495
    %v530 = vunpack.c.l.b16 %v496
    %v531 = vunpack.c.h.b16 %v496
    %v532 = vunpack.c.l.b16 %v497
    %v533 = vunpack.c.h.b16 %v497
    %v534 = vunpack.c.l.b16 %v498
    %v535 = vunpack.c.h.b16 %v498
    %v536 = vunpack.c.l.b16 %v499
    %v537 = vunpack.c.h.b16 %v499
    %v538 = vunpack.c.l.b16 %v500
    %v539 = vunpack.c.h.b16 %v500
    %v540 = vunpack.c.l.b16 %v501
    %v541 = vunpack.c.h.b16 %v501
    %v542 = vunpack.c.l.b16 %v502
    %v543 = vunpack.c.h.b16 %v502
    %v544 = vunpack.c.l.b16 %v503
    %v545 = vunpack.c.h.b16 %v503
    %v546 = vunpack.c.l.b16 %v504
    %v547 = vunpack.c.h.b16 %v504
    %v548 = vunpack.c.l.b16 %v505
    %v549 = vunpack.c.h.b16 %v505
    %v550 = vunpack.c.l.b16 %v506
    %v551 = vunpack.c.h.b16 %v506
    %v552 = vunpack.c.l.b16 %v507
    %v553 = vunpack.c.h.b16 %v507
    %v554 = vunpack.c.l.b16 %v508
    %v555 = vunpack.c.h.b16 %v508
    %v556 = vunpack.c.l.b16 %v509
    %v557 = vunpack.c.h.b16 %v509
    %v558 = vpack.c.b16 %v528, %v526
    %v559 = vpack.c.b16 %v529, %v527
    %v560 = vpack.c.b16 %v532, %v530
    %v561 = vpack.c.b16 %v533, %v531
    %v562 = vpack.c.b16 %v536, %v534
    %v563 = vpack.c.b16 %v537, %v535
    %v564 = vpack.c.b16 %v540, %v538
    %v565 = vpack.c.b16 %v541, %v539
    %v566 = vpack.c.b16 %v544, %v542
    %v567 = vpack.c.b16 %v545, %v543
    %v568 = vpack.c.b16 %v548, %v546
    %v569 = vpack.c.b16 %v549, %v547
    %v570 = vpack.c.b16 %v552, %v550
    %v571 = vpack.c.b16 %v553, %v551
    %v572 = vpack.c.b16 %v556, %v554
    %v573 = vpack.c.b16 %v557, %v555
    %590 = vmatprep.subr.bf16.mxu0 %v573
    %591 = vmatpush1.bf16.msra.mxu0 %v572
    %592 = vmatprep.subr.bf16.mxu0 %v571
    %593 = vmatpush1.bf16.msra.mxu0 %v570
    %594 = vmatprep.subr.bf16.mxu0 %v569
    %595 = vmatpush1.bf16.msra.mxu0 %v568
    %596 = vmatprep.subr.bf16.mxu0 %v567
    %597 = vmatpush1.bf16.msra.mxu0 %v566
    %598 = vmatprep.subr.bf16.mxu0 %v565
    %599 = vmatpush1.bf16.msra.mxu0 %v564
    %600 = vmatprep.subr.bf16.mxu0 %v563
    %601 = vmatpush1.bf16.msra.mxu0 %v562
    %602 = vmatprep.subr.bf16.mxu0 %v561
    %603 = vmatpush1.bf16.msra.mxu0 %v560
    %604 = vmatprep.subr.bf16.mxu0 %v559
    %605 = vmatpush1.bf16.msra.mxu0 %v558
    %606 = vmatprep.subr.bf16.mxu0 0
    %607 = vmatpush2.bf16.msra.mxu0 0
    %608 = vmatprep.subr.bf16.mxu0 0
    %609 = vmatpush2.bf16.msra.mxu0 0
    %610 = vmatprep.subr.bf16.mxu0 0
    %611 = vmatpush2.bf16.msra.mxu0 0
    %612 = vmatprep.subr.bf16.mxu0 0
    %613 = vmatpush2.bf16.msra.mxu0 0
    %614 = vmatprep.subr.bf16.mxu0 0
    %615 = vmatpush2.bf16.msra.mxu0 0
    %616 = vmatprep.subr.bf16.mxu0 0
    %617 = vmatpush2.bf16.msra.mxu0 0
    %618 = vmatprep.subr.bf16.mxu0 0
    %619 = vmatpush2.bf16.msra.mxu0 0
    %620 = vmatprep.subr.bf16.mxu0 0
    %621 = vmatpush2.bf16.msra.mxu0 0
    %622 = vmatprep.mubr.bf16.mxu0 0
    %623 = vmatmul.mubr.bf16.gmra.mxu0 %v493
    %v624 = vpop.f32.mrf.mxu0
    %v625 = vadd.f32 0.0, %v624
    %v626 = vpop.f32.mrf.mxu0
    %v627 = vadd.f32 0.0, %v626
    %v628 = vpop.f32.mrf.mxu0
    %v629 = vadd.f32 0.0, %v628
    %v630 = vpop.f32.mrf.mxu0
    %v631 = vadd.f32 0.0, %v630
    %632 = vdwg.mxu0
    %v697 = vunpack.c.l.b16 %v429
    %v698 = vunpack.c.h.b16 %v429
    %v699 = vunpack.c.l.b16 %v430
    %v700 = vunpack.c.h.b16 %v430
    %v701 = vunpack.c.l.b16 %v431
    %v702 = vunpack.c.h.b16 %v431
    %v703 = vunpack.c.l.b16 %v432
    %v704 = vunpack.c.h.b16 %v432
    %v705 = vunpack.c.l.b16 %v433
    %v706 = vunpack.c.h.b16 %v433
    %v707 = vunpack.c.l.b16 %v434
    %v708 = vunpack.c.h.b16 %v434
    %v709 = vunpack.c.l.b16 %v435
    %v710 = vunpack.c.h.b16 %v435
    %v711 = vunpack.c.l.b16 %v436
    %v712 = vunpack.c.h.b16 %v436
    %v713 = vunpack.c.l.b16 %v437
    %v714 = vunpack.c.h.b16 %v437
    %v715 = vunpack.c.l.b16 %v438
    %v716 = vunpack.c.h.b16 %v438
    %v717 = vunpack.c.l.b16 %v439
    %v718 = vunpack.c.h.b16 %v439
    %v719 = vunpack.c.l.b16 %v440
    %v720 = vunpack.c.h.b16 %v440
    %v721 = vunpack.c.l.b16 %v441
    %v722 = vunpack.c.h.b16 %v441
    %v723 = vunpack.c.l.b16 %v442
    %v724 = vunpack.c.h.b16 %v442
    %v725 = vunpack.c.l.b16 %v443
    %v726 = vunpack.c.h.b16 %v443
    %v727 = vunpack.c.l.b16 %v444
    %v728 = vunpack.c.h.b16 %v444
    %v729 = vunpack.c.l.b16 %v445
    %v730 = vunpack.c.h.b16 %v445
    %v731 = vunpack.c.l.b16 %v446
    %v732 = vunpack.c.h.b16 %v446
    %v733 = vunpack.c.l.b16 %v447
    %v734 = vunpack.c.h.b16 %v447
    %v735 = vunpack.c.l.b16 %v448
    %v736 = vunpack.c.h.b16 %v448
    %v737 = vunpack.c.l.b16 %v449
    %v738 = vunpack.c.h.b16 %v449
    %v739 = vunpack.c.l.b16 %v450
    %v740 = vunpack.c.h.b16 %v450
    %v741 = vunpack.c.l.b16 %v451
    %v742 = vunpack.c.h.b16 %v451
    %v743 = vunpack.c.l.b16 %v452
    %v744 = vunpack.c.h.b16 %v452
    %v745 = vunpack.c.l.b16 %v453
    %v746 = vunpack.c.h.b16 %v453
    %v747 = vunpack.c.l.b16 %v454
    %v748 = vunpack.c.h.b16 %v454
    %v749 = vunpack.c.l.b16 %v455
    %v750 = vunpack.c.h.b16 %v455
    %v751 = vunpack.c.l.b16 %v456
    %v752 = vunpack.c.h.b16 %v456
    %v753 = vunpack.c.l.b16 %v457
    %v754 = vunpack.c.h.b16 %v457
    %v755 = vunpack.c.l.b16 %v458
    %v756 = vunpack.c.h.b16 %v458
    %v757 = vunpack.c.l.b16 %v459
    %v758 = vunpack.c.h.b16 %v459
    %v759 = vunpack.c.l.b16 %v460
    %v760 = vunpack.c.h.b16 %v460
    %v761 = vunpack.c.l.b16 %v461
    %v762 = vunpack.c.h.b16 %v461
    %v763 = vunpack.c.l.b16 %v462
    %v764 = vunpack.c.h.b16 %v462
    %v765 = vunpack.c.l.b16 %v463
    %v766 = vunpack.c.h.b16 %v463
    %v767 = vunpack.c.l.b16 %v464
    %v768 = vunpack.c.h.b16 %v464
    %v769 = vunpack.c.l.b16 %v465
    %v770 = vunpack.c.h.b16 %v465
    %v771 = vunpack.c.l.b16 %v466
    %v772 = vunpack.c.h.b16 %v466
    %v773 = vunpack.c.l.b16 %v467
    %v774 = vunpack.c.h.b16 %v467
    %v775 = vunpack.c.l.b16 %v468
    %v776 = vunpack.c.h.b16 %v468
    %v777 = vunpack.c.l.b16 %v469
    %v778 = vunpack.c.h.b16 %v469
    %v779 = vunpack.c.l.b16 %v470
    %v780 = vunpack.c.h.b16 %v470
    %v781 = vunpack.c.l.b16 %v471
    %v782 = vunpack.c.h.b16 %v471
    %v783 = vunpack.c.l.b16 %v472
    %v784 = vunpack.c.h.b16 %v472
    %v785 = vunpack.c.l.b16 %v473
    %v786 = vunpack.c.h.b16 %v473
    %v787 = vunpack.c.l.b16 %v474
    %v788 = vunpack.c.h.b16 %v474
    %v789 = vunpack.c.l.b16 %v475
    %v790 = vunpack.c.h.b16 %v475
    %v791 = vunpack.c.l.b16 %v476
    %v792 = vunpack.c.h.b16 %v476
    %v793 = vunpack.c.l.b16 %v477
    %v794 = vunpack.c.h.b16 %v477
    %v795 = vunpack.c.l.b16 %v478
    %v796 = vunpack.c.h.b16 %v478
    %v797 = vunpack.c.l.b16 %v479
    %v798 = vunpack.c.h.b16 %v479
    %v799 = vunpack.c.l.b16 %v480
    %v800 = vunpack.c.h.b16 %v480
    %v801 = vunpack.c.l.b16 %v481
    %v802 = vunpack.c.h.b16 %v481
    %v803 = vunpack.c.l.b16 %v482
    %v804 = vunpack.c.h.b16 %v482
    %v805 = vunpack.c.l.b16 %v483
    %v806 = vunpack.c.h.b16 %v483
    %v807 = vunpack.c.l.b16 %v484
    %v808 = vunpack.c.h.b16 %v484
    %v809 = vunpack.c.l.b16 %v485
    %v810 = vunpack.c.h.b16 %v485
    %v811 = vunpack.c.l.b16 %v486
    %v812 = vunpack.c.h.b16 %v486
    %v813 = vunpack.c.l.b16 %v487
    %v814 = vunpack.c.h.b16 %v487
    %v815 = vunpack.c.l.b16 %v488
    %v816 = vunpack.c.h.b16 %v488
    %v817 = vunpack.c.l.b16 %v489
    %v818 = vunpack.c.h.b16 %v489
    %v819 = vunpack.c.l.b16 %v490
    %v820 = vunpack.c.h.b16 %v490
    %v821 = vunpack.c.l.b16 %v491
    %v822 = vunpack.c.h.b16 %v491
    %v823 = vunpack.c.l.b16 %v492
    %v824 = vunpack.c.h.b16 %v492
    %v825 = vpack.c.b16 %v699, %v697
    %v826 = vpack.c.b16 %v700, %v698
    %v827 = vpack.c.b16 %v703, %v701
    %v828 = vpack.c.b16 %v704, %v702
    %v829 = vpack.c.b16 %v707, %v705
    %v830 = vpack.c.b16 %v708, %v706
    %v831 = vpack.c.b16 %v711, %v709
    %v832 = vpack.c.b16 %v712, %v710
    %v833 = vpack.c.b16 %v715, %v713
    %v834 = vpack.c.b16 %v716, %v714
    %v835 = vpack.c.b16 %v719, %v717
    %v836 = vpack.c.b16 %v720, %v718
    %v837 = vpack.c.b16 %v723, %v721
    %v838 = vpack.c.b16 %v724, %v722
    %v839 = vpack.c.b16 %v727, %v725
    %v840 = vpack.c.b16 %v728, %v726
    %v841 = vpack.c.b16 %v731, %v729
    %v842 = vpack.c.b16 %v732, %v730
    %v843 = vpack.c.b16 %v735, %v733
    %v844 = vpack.c.b16 %v736, %v734
    %v845 = vpack.c.b16 %v739, %v737
    %v846 = vpack.c.b16 %v740, %v738
    %v847 = vpack.c.b16 %v743, %v741
    %v848 = vpack.c.b16 %v744, %v742
    %v849 = vpack.c.b16 %v747, %v745
    %v850 = vpack.c.b16 %v748, %v746
    %v851 = vpack.c.b16 %v751, %v749
    %v852 = vpack.c.b16 %v752, %v750
    %v853 = vpack.c.b16 %v755, %v753
    %v854 = vpack.c.b16 %v756, %v754
    %v855 = vpack.c.b16 %v759, %v757
    %v856 = vpack.c.b16 %v760, %v758
    %v857 = vpack.c.b16 %v763, %v761
    %v858 = vpack.c.b16 %v764, %v762
    %v859 = vpack.c.b16 %v767, %v765
    %v860 = vpack.c.b16 %v768, %v766
    %v861 = vpack.c.b16 %v771, %v769
    %v862 = vpack.c.b16 %v772, %v770
    %v863 = vpack.c.b16 %v775, %v773
    %v864 = vpack.c.b16 %v776, %v774
    %v865 = vpack.c.b16 %v779, %v777
    %v866 = vpack.c.b16 %v780, %v778
    %v867 = vpack.c.b16 %v783, %v781
    %v868 = vpack.c.b16 %v784, %v782
    %v869 = vpack.c.b16 %v787, %v785
    %v870 = vpack.c.b16 %v788, %v786
    %v871 = vpack.c.b16 %v791, %v789
    %v872 = vpack.c.b16 %v792, %v790
    %v873 = vpack.c.b16 %v795, %v793
    %v874 = vpack.c.b16 %v796, %v794
    %v875 = vpack.c.b16 %v799, %v797
    %v876 = vpack.c.b16 %v800, %v798
    %v877 = vpack.c.b16 %v803, %v801
    %v878 = vpack.c.b16 %v804, %v802
    %v879 = vpack.c.b16 %v807, %v805
    %v880 = vpack.c.b16 %v808, %v806
    %v881 = vpack.c.b16 %v811, %v809
    %v882 = vpack.c.b16 %v812, %v810
    %v883 = vpack.c.b16 %v815, %v813
    %v884 = vpack.c.b16 %v816, %v814
    %v885 = vpack.c.b16 %v819, %v817
    %v886 = vpack.c.b16 %v820, %v818
    %v887 = vpack.c.b16 %v823, %v821
    %v888 = vpack.c.b16 %v824, %v822
    %953 = vmatprep.subr.bf16.mxu0 %v840
    %954 = vmatpush1.bf16.msra.mxu0 %v839
    %955 = vmatprep.subr.bf16.mxu0 %v838
    %956 = vmatpush1.bf16.msra.mxu0 %v837
    %957 = vmatprep.subr.bf16.mxu0 %v836
    %958 = vmatpush1.bf16.msra.mxu0 %v835
    %959 = vmatprep.subr.bf16.mxu0 %v834
    %960 = vmatpush1.bf16.msra.mxu0 %v833
    %961 = vmatprep.subr.bf16.mxu0 %v832
    %962 = vmatpush1.bf16.msra.mxu0 %v831
    %963 = vmatprep.subr.bf16.mxu0 %v830
    %964 = vmatpush1.bf16.msra.mxu0 %v829
    %965 = vmatprep.subr.bf16.mxu0 %v828
    %966 = vmatpush1.bf16.msra.mxu0 %v827
    %967 = vmatprep.subr.bf16.mxu0 %v826
    %968 = vmatpush1.bf16.msra.mxu0 %v825
    %969 = vmatprep.subr.bf16.mxu0 %v856
    %970 = vmatpush2.bf16.msra.mxu0 %v855
    %971 = vmatprep.subr.bf16.mxu0 %v854
    %972 = vmatpush2.bf16.msra.mxu0 %v853
    %973 = vmatprep.subr.bf16.mxu0 %v852
    %974 = vmatpush2.bf16.msra.mxu0 %v851
    %975 = vmatprep.subr.bf16.mxu0 %v850
    %976 = vmatpush2.bf16.msra.mxu0 %v849
    %977 = vmatprep.subr.bf16.mxu0 %v848
    %978 = vmatpush2.bf16.msra.mxu0 %v847
    %979 = vmatprep.subr.bf16.mxu0 %v846
    %980 = vmatpush2.bf16.msra.mxu0 %v845
    %981 = vmatprep.subr.bf16.mxu0 %v844
    %982 = vmatpush2.bf16.msra.mxu0 %v843
    %983 = vmatprep.subr.bf16.mxu0 %v842
    %984 = vmatpush2.bf16.msra.mxu0 %v841
    %985 = vmatprep.mubr.bf16.mxu0 %v426
    %986 = vmatmul.mubr.bf16.gmra.mxu0 %v425
    %v987 = vpop.f32.mrf.mxu0
    %v988 = vadd.f32 %v625, %v987
    %v989 = vpop.f32.mrf.mxu0
    %v990 = vadd.f32 %v627, %v989
    %v991 = vpop.f32.mrf.mxu0
    %v992 = vadd.f32 %v629, %v991
    %v993 = vpop.f32.mrf.mxu0
    %v994 = vadd.f32 %v631, %v993
    %995 = vdwg.mxu0
    %996 = vmatprep.subr.bf16.mxu0 %v872
    %997 = vmatpush1.bf16.msra.mxu0 %v871
    %998 = vmatprep.subr.bf16.mxu0 %v870
    %999 = vmatpush1.bf16.msra.mxu0 %v869
    %1000 = vmatprep.subr.bf16.mxu0 %v868
    %1001 = vmatpush1.bf16.msra.mxu0 %v867
    %1002 = vmatprep.subr.bf16.mxu0 %v866
    %1003 = vmatpush1.bf16.msra.mxu0 %v865
    %1004 = vmatprep.subr.bf16.mxu0 %v864
    %1005 = vmatpush1.bf16.msra.mxu0 %v863
    %1006 = vmatprep.subr.bf16.mxu0 %v862
    %1007 = vmatpush1.bf16.msra.mxu0 %v861
    %1008 = vmatprep.subr.bf16.mxu0 %v860
    %1009 = vmatpush1.bf16.msra.mxu0 %v859
    %1010 = vmatprep.subr.bf16.mxu0 %v858
    %1011 = vmatpush1.bf16.msra.mxu0 %v857
    %1012 = vmatprep.subr.bf16.mxu0 %v888
    %1013 = vmatpush2.bf16.msra.mxu0 %v887
    %1014 = vmatprep.subr.bf16.mxu0 %v886
    %1015 = vmatpush2.bf16.msra.mxu0 %v885
    %1016 = vmatprep.subr.bf16.mxu0 %v884
    %1017 = vmatpush2.bf16.msra.mxu0 %v883
    %1018 = vmatprep.subr.bf16.mxu0 %v882
    %1019 = vmatpush2.bf16.msra.mxu0 %v881
    %1020 = vmatprep.subr.bf16.mxu0 %v880
    %1021 = vmatpush2.bf16.msra.mxu0 %v879
    %1022 = vmatprep.subr.bf16.mxu0 %v878
    %1023 = vmatpush2.bf16.msra.mxu0 %v877
    %1024 = vmatprep.subr.bf16.mxu0 %v876
    %1025 = vmatpush2.bf16.msra.mxu0 %v875
    %1026 = vmatprep.subr.bf16.mxu0 %v874
    %1027 = vmatpush2.bf16.msra.mxu0 %v873
    %1028 = vmatprep.mubr.bf16.mxu0 %v428
    %1029 = vmatmul.mubr.bf16.gmra.mxu0 %v427
    %v1030 = vpop.f32.mrf.mxu0
    %v1031 = vadd.f32 %v988, %v1030
    %v1032 = vpop.f32.mrf.mxu0
    %v1033 = vadd.f32 %v990, %v1032
    %v1034 = vpop.f32.mrf.mxu0
    %v1035 = vadd.f32 %v992, %v1034
    %v1036 = vpop.f32.mrf.mxu0
    %v1037 = vadd.f32 %v994, %v1036
    %1038 = vdwg.mxu0
    %v1039 = vld [vmem:[%s12] sm:$0x3]
    %v1041 = vlaneseq
    %v1042 = vshrl.u32 %v1041, 7
    %v1043 = vsub.s32 0, %v1042
    %v1044 = vrot.slane %v1039, %v1043
    %v1045 = vlaneseq
    %v1046 = vshrl.u32 %v1045, 7
    %v1047 = vsub.s32 1, %v1046
    %v1048 = vrot.slane %v1039, %v1047
    %v1051 = vadd.f32 %v1031, %v1044
    %v1052 = vadd.f32 %v1033, %v1048
    %v1053 = vadd.f32 %v1035, %v1044
    %v1054 = vadd.f32 %v1037, %v1048
    %v1055 = vmax.f32 %v1051, 0.0
    %v1056 = vmax.f32 %v1052, 0.0
    %v1057 = vmax.f32 %v1053, 0.0
    %v1058 = vmax.f32 %v1054, 0.0
    %v1059 = vpack.c.bf16 %v1057, %v1055
    %v1060 = vpack.c.bf16 %v1058, %v1056
    %v1061 = vld [vmem:[%s13] sm:$0xf]
    %v1062 = vld [vmem:[%s13 + $0x4] sm:$0xf]
    %v1063 = vld [vmem:[%s13 + $0x8] sm:$0xf]
    %v1064 = vld [vmem:[%s13 + $0xc] sm:$0xf]
    %v1065 = vld [vmem:[%s13 + $0x10] sm:$0xf]
    %v1066 = vld [vmem:[%s13 + $0x14] sm:$0xf]
    %v1067 = vld [vmem:[%s13 + $0x18] sm:$0xf]
    %v1068 = vld [vmem:[%s13 + $0x1c] sm:$0xf]
    %v1069 = vld [vmem:[%s13 + $0x20] sm:$0xf]
    %v1070 = vld [vmem:[%s13 + $0x24] sm:$0xf]
    %v1071 = vld [vmem:[%s13 + $0x28] sm:$0xf]
    %v1072 = vld [vmem:[%s13 + $0x2c] sm:$0xf]
    %v1073 = vld [vmem:[%s13 + $0x30] sm:$0xf]
    %v1074 = vld [vmem:[%s13 + $0x34] sm:$0xf]
    %v1075 = vld [vmem:[%s13 + $0x38] sm:$0xf]
    %v1076 = vld [vmem:[%s13 + $0x3c] sm:$0xf]
    %v1077 = vld [vmem:[%s13 + $0x40] sm:$0xf]
    %v1078 = vld [vmem:[%s13 + $0x44] sm:$0xf]
    %v1079 = vld [vmem:[%s13 + $0x48] sm:$0xf]
    %v1080 = vld [vmem:[%s13 + $0x4c] sm:$0xf]
    %v1081 = vld [vmem:[%s13 + $0x50] sm:$0xf]
    %v1082 = vld [vmem:[%s13 + $0x54] sm:$0xf]
    %v1083 = vld [vmem:[%s13 + $0x58] sm:$0xf]
    %v1084 = vld [vmem:[%s13 + $0x5c] sm:$0xf]
    %v1085 = vld [vmem:[%s13 + $0x60] sm:$0xf]
    %v1086 = vld [vmem:[%s13 + $0x64] sm:$0xf]
    %v1087 = vld [vmem:[%s13 + $0x68] sm:$0xf]
    %v1088 = vld [vmem:[%s13 + $0x6c] sm:$0xf]
    %v1089 = vld [vmem:[%s13 + $0x70] sm:$0xf]
    %v1090 = vld [vmem:[%s13 + $0x74] sm:$0xf]
    %v1091 = vld [vmem:[%s13 + $0x78] sm:$0xf]
    %v1092 = vld [vmem:[%s13 + $0x7c] sm:$0xf]
    %v1093 = vld [vmem:[%s14] sm:$0x1]
    %v1095 = vlaneseq
    %v1096 = vshrl.u32 %v1095, 7
    %v1097 = vsub.s32 0, %v1096
    %v1098 = vrot.slane %v1093, %v1097
    %v1132 = vunpack.c.l.b16 %v1061
    %v1133 = vunpack.c.l.b16 %v1062
    %v1134 = vunpack.c.l.b16 %v1063
    %v1135 = vunpack.c.l.b16 %v1064
    %v1136 = vunpack.c.l.b16 %v1065
    %v1137 = vunpack.c.l.b16 %v1066
    %v1138 = vunpack.c.l.b16 %v1067
    %v1139 = vunpack.c.l.b16 %v1068
    %v1140 = vunpack.c.l.b16 %v1069
    %v1141 = vunpack.c.l.b16 %v1070
    %v1142 = vunpack.c.l.b16 %v1071
    %v1143 = vunpack.c.l.b16 %v1072
    %v1144 = vunpack.c.l.b16 %v1073
    %v1145 = vunpack.c.l.b16 %v1074
    %v1146 = vunpack.c.l.b16 %v1075
    %v1147 = vunpack.c.l.b16 %v1076
    %v1148 = vunpack.c.l.b16 %v1077
    %v1149 = vunpack.c.l.b16 %v1078
    %v1150 = vunpack.c.l.b16 %v1079
    %v1151 = vunpack.c.l.b16 %v1080
    %v1152 = vunpack.c.l.b16 %v1081
    %v1153 = vunpack.c.l.b16 %v1082
    %v1154 = vunpack.c.l.b16 %v1083
    %v1155 = vunpack.c.l.b16 %v1084
    %v1156 = vunpack.c.l.b16 %v1085
    %v1157 = vunpack.c.l.b16 %v1086
    %v1158 = vunpack.c.l.b16 %v1087
    %v1159 = vunpack.c.l.b16 %v1088
    %v1160 = vunpack.c.l.b16 %v1089
    %v1161 = vunpack.c.l.b16 %v1090
    %v1162 = vunpack.c.l.b16 %v1091
    %v1163 = vunpack.c.l.b16 %v1092
    %v1164 = vpack.c.b16 %v1133, %v1132
    %v1165 = vpack.c.b16 %v1135, %v1134
    %v1166 = vpack.c.b16 %v1137, %v1136
    %v1167 = vpack.c.b16 %v1139, %v1138
    %v1168 = vpack.c.b16 %v1141, %v1140
    %v1169 = vpack.c.b16 %v1143, %v1142
    %v1170 = vpack.c.b16 %v1145, %v1144
    %v1171 = vpack.c.b16 %v1147, %v1146
    %v1172 = vpack.c.b16 %v1149, %v1148
    %v1173 = vpack.c.b16 %v1151, %v1150
    %v1174 = vpack.c.b16 %v1153, %v1152
    %v1175 = vpack.c.b16 %v1155, %v1154
    %v1176 = vpack.c.b16 %v1157, %v1156
    %v1177 = vpack.c.b16 %v1159, %v1158
    %v1178 = vpack.c.b16 %v1161, %v1160
    %v1179 = vpack.c.b16 %v1163, %v1162
    %1196 = vmatprep.subr.bf16.mxu0 0
    %1197 = vmatpush1.bf16.msra.mxu0 %v1171
    %1198 = vmatprep.subr.bf16.mxu0 0
    %1199 = vmatpush1.bf16.msra.mxu0 %v1170
    %1200 = vmatprep.subr.bf16.mxu0 0
    %1201 = vmatpush1.bf16.msra.mxu0 %v1169
    %1202 = vmatprep.subr.bf16.mxu0 0
    %1203 = vmatpush1.bf16.msra.mxu0 %v1168
    %1204 = vmatprep.subr.bf16.mxu0 0
    %1205 = vmatpush1.bf16.msra.mxu0 %v1167
    %1206 = vmatprep.subr.bf16.mxu0 0
    %1207 = vmatpush1.bf16.msra.mxu0 %v1166
    %1208 = vmatprep.subr.bf16.mxu0 0
    %1209 = vmatpush1.bf16.msra.mxu0 %v1165
    %1210 = vmatprep.subr.bf16.mxu0 0
    %1211 = vmatpush1.bf16.msra.mxu0 %v1164
    %1212 = vmatprep.subr.bf16.mxu0 0
    %1213 = vmatpush2.bf16.msra.mxu0 %v1179
    %1214 = vmatprep.subr.bf16.mxu0 0
    %1215 = vmatpush2.bf16.msra.mxu0 %v1178
    %1216 = vmatprep.subr.bf16.mxu0 0
    %1217 = vmatpush2.bf16.msra.mxu0 %v1177
    %1218 = vmatprep.subr.bf16.mxu0 0
    %1219 = vmatpush2.bf16.msra.mxu0 %v1176
    %1220 = vmatprep.subr.bf16.mxu0 0
    %1221 = vmatpush2.bf16.msra.mxu0 %v1175
    %1222 = vmatprep.subr.bf16.mxu0 0
    %1223 = vmatpush2.bf16.msra.mxu0 %v1174
    %1224 = vmatprep.subr.bf16.mxu0 0
    %1225 = vmatpush2.bf16.msra.mxu0 %v1173
    %1226 = vmatprep.subr.bf16.mxu0 0
    %1227 = vmatpush2.bf16.msra.mxu0 %v1172
    %1228 = vmatprep.mubr.bf16.mxu0 %v1060
    %1229 = vmatmul.mubr.bf16.gmra.mxu0 %v1059
    %v1230 = vpop.f32.mrf.mxu0
    %v1231 = vadd.f32 %v1098, %v1230
    %v1232 = vpop.f32.mrf.mxu0
    %v1233 = vpop.f32.mrf.mxu0
    %v1234 = vadd.f32 %v1098, %v1233
    %v1235 = vpop.f32.mrf.mxu0
    %1236 = vdwg.mxu0
    %1237 = vst [vmem:[%s15] sm:$0xff] %v1231
    %1238 = vst [vmem:[%s15 + $0x8] sm:$0xff] %v1234
    // Predicated region
    $region66: #{combined_model_forward.1} parent=1 // pred_check
      _
    $region67: #{combined_model_forward.1} parent=1 // pred_check_branch
      %1240 = sbr.rel (0) target = $region69
    $region68: #{combined_model_forward.1} parent=1 // pred_region
      _
    $region69: #{combined_model_forward.1} parent=1 // pred_fallthru
      _
    // Predicated region
    $region70: #{combined_model_forward.1} parent=1 // pred_check
      _
    $region71: #{combined_model_forward.1} parent=1 // pred_check_branch
      %1242 = sbr.rel (0) target = $region73
    $region72: #{combined_model_forward.1} parent=1 // pred_region
      _
    $region73: #{combined_model_forward.1} parent=1 // pred_fallthru
      _
    %1243 = vsyncpa [#allocation3], 1

</llo_original>
